<compile_context>
chip_gen: v7x
topology: tpu7x:2x2x1
jax: 0.10.0
libtpu: 0.0.40
codegen_flags: <defaults>
</compile_context>

<pallas_src>
import functools

import jax
import jax.numpy as jnp
from jax.experimental import pallas as pl
from jax.experimental.pallas import tpu as pltpu


def _joints_kld_kernel(pred_ref, gt_ref, w_ref, out_ref, *, total_rows):
    # pred_ref / gt_ref: (TR, N); w_ref: (TR, 1); out_ref: (1, 8, 128)
    tr = pred_ref.shape[0]

    # Upcast per-tile to f32 (supports bf16 inputs; v5e lacks bf16 VPU/EUP).
    pred = pred_ref[...].astype(jnp.float32)
    gt = gt_ref[...].astype(jnp.float32)
    w = w_ref[...].astype(jnp.float32)

    # Hoist the (TR,1) -> (TR,N) lane-broadcast of w once (no CSE of
    # broadcast_in_dim), then reuse it for both weighted logits.
    wb = jnp.broadcast_to(w, pred.shape)
    xp = pred * wb
    xg = gt * wb

    max_p = jnp.max(xp, axis=1, keepdims=True)                  # (TR, 1)
    max_g = jnp.max(xg, axis=1, keepdims=True)                  # (TR, 1)

    z_p = jnp.sum(jnp.exp(xp - max_p), axis=1, keepdims=True)   # (TR, 1)
    eg = jnp.exp(xg - max_g)                                    # (TR, N)
    z_g = jnp.sum(eg, axis=1, keepdims=True)                    # (TR, 1)

    # row KL = E_q[xg_shift - xp_shift] + log Z_p - log Z_g   (sum(q) == 1),
    # with xg_shift - xp_shift = (xg - xp) - (max_g - max_p).
    # eg == 0 (underflow) elements contribute exactly 0, matching torch's
    # kl_div handling of target == 0.
    s = jnp.sum(eg * (xg - xp), axis=1, keepdims=True)          # (TR, 1)
    row_kl = s / z_g - (max_g - max_p) + jnp.log(z_p) - jnp.log(z_g)

    # Tail-block masking: contents beyond the array extent are undefined (not
    # zero), so explicitly zero row_kl for out-of-range rows.  Skipped at
    # trace time when the grid divides R exactly.
    if total_rows % tr != 0:
        row0 = pl.program_id(0) * tr
        rows = row0 + jax.lax.broadcasted_iota(jnp.int32, row_kl.shape, 0)
        row_kl = jnp.where(rows < total_rows, row_kl, 0.0)

    partial = jnp.sum(row_kl)
    # Broadcast the block partial over the (8,128)-aligned output block; the
    # wrapper reads out[:, 0, 0] and reduces (negligible vs. the main pass).
    out_ref[...] = jnp.full(out_ref.shape, partial, dtype=out_ref.dtype)


def _round_up(x, m):
    return ((x + m - 1) // m) * m


@functools.partial(jax.jit, static_argnames=("block_rows",))
def joints_kld_loss(output, target, target_weight, *, block_rows=None):
    """output, target: (B, J, W, H); target_weight: (B, J, 1). Returns scalar f32."""
    B, J, W, H = output.shape
    N = W * H
    R = B * J

    # Contiguous reshapes only — no transposes, no padding, no extra HBM passes.
    pred = output.reshape(R, N)
    gt = target.reshape(R, N)
    w = target_weight.reshape(R, 1)

    # Row-tile selection: multiple of 8 sublanes.  Budget assumes ~10 live
    # f32 (tr, N) tiles at peak (2 inputs x 2 pipeline DMA buffers plus ~5-6
    # in-kernel temporaries) and keeps them under ~32 MiB so the kernel fits
    # v7x's 64 MiB physical VMEM with headroom.
    if block_rows is not None:
        tr = _round_up(max(int(block_rows), 1), 8)   # guard: sublane multiple of 8
    else:
        budget = 32 * 1024 * 1024
        tr = 256
        while tr > 8 and 10 * tr * N * 4 > budget:
            tr //= 2
    tr = max(8, min(tr, _round_up(R, 8)))

    grid = (pl.cdiv(R, tr),)
    g = grid[0]

    kernel = functools.partial(_joints_kld_kernel, total_rows=R)

    # 40 MiB covers the autoselected tile comfortably; scale up if the caller
    # forces a larger tile (still their responsibility to stay under physical
    # VMEM on the target chip).
    vmem_limit = int(max(40 * 1024 * 1024, 10 * tr * N * 4 + (4 << 20)))

    out = pl.pallas_call(
        kernel,
        out_shape=jax.ShapeDtypeStruct((g, 8, 128), jnp.float32),
        grid_spec=pltpu.PrefetchScalarGridSpec(
            num_scalar_prefetch=0,
            grid=grid,
            in_specs=[
                pl.BlockSpec((tr, N), lambda i: (i, 0)),
                pl.BlockSpec((tr, N), lambda i: (i, 0)),
                pl.BlockSpec((tr, 1), lambda i: (i, 0)),
            ],
            out_specs=pl.BlockSpec((1, 8, 128), lambda i: (i, 0, 0)),
        ),
        compiler_params=pltpu.CompilerParams(
            dimension_semantics=("parallel",),
            vmem_limit_bytes=vmem_limit,
        ),
    )(pred, gt, w)

    total = jnp.sum(out[:, 0, 0])
    # Normalize with the true batch size and spatial extent (closure constants).
    return total / (B * N)


def _reference(output, target, target_weight):
    B, J, W, H = output.shape
    N = W * H
    pred = output.reshape(B, J, N)
    gt = target.reshape(B, J, N)
    w = target_weight.reshape(B, J, 1)
    xp = pred * w
    xg = gt * w
    log_p = jax.nn.log_softmax(xp, axis=2)
    q = jax.nn.softmax(xg, axis=2)
    kl = q * (jnp.log(jnp.where(q > 0, q, 1.0)) - log_p)
    return jnp.sum(kl) / B / N


if __name__ == "__main__":
    key = jax.random.PRNGKey(0)
    k1, k2, k3 = jax.random.split(key, 3)

    B, J, W, H = 2, 4, 16, 16
    output = jax.random.normal(k1, (B, J, W, H), dtype=jnp.float32)
    target = jax.random.normal(k2, (B, J, W, H), dtype=jnp.float32)
    # target_weight in [0, 1], shape (B, J, 1) as in pose-estimation pipelines.
    target_weight = jax.random.uniform(k3, (B, J, 1), dtype=jnp.float32)

    loss = joints_kld_loss(output, target, target_weight)
    jax.block_until_ready(loss)

    ref = _reference(output, target, target_weight)
    assert jnp.allclose(loss, ref, rtol=2e-5, atol=1e-6), (loss, ref)

    print("KERNEL_OK")
</pallas_src>

<mosaic_0001>
module attributes {stable_mosaic.version = 11 : i64} {
  func.func @_joints_kld_kernel(%arg0: i32, %arg1: memref<8x256xf32, #tpu.memory_space<vmem>>, %arg2: memref<8x256xf32, #tpu.memory_space<vmem>>, %arg3: memref<8x1xf32, #tpu.memory_space<vmem>>, %arg4: memref<1x8x128xf32, #tpu.memory_space<vmem>>) attributes {dimension_semantics = [#tpu.dimension_semantics<parallel>], iteration_bounds = array<i64: 1>, scalar_prefetch = 0 : i64, scratch_operands = 0 : i64, tpu.core_type = #tpu.core_type<tc>, window_params = [{transform_indices = @transform_0, window_bounds = array<i64: 8, 256>}, {transform_indices = @transform_1, window_bounds = array<i64: 8, 256>}, {transform_indices = @transform_2, window_bounds = array<i64: 8, 1>}, {transform_indices = @transform_3, window_bounds = array<i64: 1, 8, 128>}]} {
    %c0 = arith.constant 0 : index
    %c0_0 = arith.constant 0 : index
    %0 = vector.load %arg1[%c0, %c0_0] : memref<8x256xf32, #tpu.memory_space<vmem>>, vector<8x256xf32>
    %c0_1 = arith.constant 0 : index
    %c0_2 = arith.constant 0 : index
    %1 = vector.load %arg2[%c0_1, %c0_2] : memref<8x256xf32, #tpu.memory_space<vmem>>, vector<8x256xf32>
    %c0_3 = arith.constant 0 : index
    %c0_4 = arith.constant 0 : index
    %2 = vector.load %arg3[%c0_3, %c0_4] : memref<8x1xf32, #tpu.memory_space<vmem>>, vector<8x1xf32>
    %3 = vector.shape_cast %2 : vector<8x1xf32> to vector<8x1xf32>
    %4 = vector.broadcast %3 : vector<8x1xf32> to vector<8x256xf32>
    %5 = arith.mulf %0, %4 : vector<8x256xf32>
    %6 = arith.mulf %1, %4 : vector<8x256xf32>
    %cst = arith.constant dense<0xFF800000> : vector<8xf32>
    %7 = vector.multi_reduction <maximumf>, %5, %cst [1] : vector<8x256xf32> to vector<8xf32>
    %8 = vector.shape_cast %7 : vector<8xf32> to vector<8x1xf32>
    %cst_5 = arith.constant dense<0xFF800000> : vector<8xf32>
    %9 = vector.multi_reduction <maximumf>, %6, %cst_5 [1] : vector<8x256xf32> to vector<8xf32>
    %10 = vector.shape_cast %9 : vector<8xf32> to vector<8x1xf32>
    %11 = vector.broadcast %8 : vector<8x1xf32> to vector<8x256xf32>
    %12 = arith.subf %5, %11 : vector<8x256xf32>
    %13 = math.exp %12 : vector<8x256xf32>
    %cst_6 = arith.constant dense<0.000000e+00> : vector<8xf32>
    %14 = vector.multi_reduction <add>, %13, %cst_6 [1] : vector<8x256xf32> to vector<8xf32>
    %15 = vector.shape_cast %14 : vector<8xf32> to vector<8x1xf32>
    %16 = vector.broadcast %10 : vector<8x1xf32> to vector<8x256xf32>
    %17 = arith.subf %6, %16 : vector<8x256xf32>
    %18 = math.exp %17 : vector<8x256xf32>
    %cst_7 = arith.constant dense<0.000000e+00> : vector<8xf32>
    %19 = vector.multi_reduction <add>, %18, %cst_7 [1] : vector<8x256xf32> to vector<8xf32>
    %20 = vector.shape_cast %19 : vector<8xf32> to vector<8x1xf32>
    %21 = arith.subf %6, %5 : vector<8x256xf32>
    %22 = arith.mulf %18, %21 : vector<8x256xf32>
    %cst_8 = arith.constant dense<0.000000e+00> : vector<8xf32>
    %23 = vector.multi_reduction <add>, %22, %cst_8 [1] : vector<8x256xf32> to vector<8xf32>
    %24 = vector.shape_cast %23 : vector<8xf32> to vector<8x1xf32>
    %25 = arith.divf %24, %20 : vector<8x1xf32>
    %26 = arith.subf %10, %8 : vector<8x1xf32>
    %27 = arith.subf %25, %26 : vector<8x1xf32>
    %28 = math.log %15 : vector<8x1xf32>
    %29 = arith.addf %27, %28 : vector<8x1xf32>
    %30 = math.log %20 : vector<8x1xf32>
    %31 = arith.subf %29, %30 : vector<8x1xf32>
    %32 = vector.shape_cast %31 : vector<8x1xf32> to vector<1x8x1xf32>
    %cst_9 = arith.constant dense<0.000000e+00> : vector<1xf32>
    %33 = vector.multi_reduction <add>, %32, %cst_9 [1, 2] : vector<1x8x1xf32> to vector<1xf32>
    %34 = vector.shape_cast %33 : vector<1xf32> to vector<1x1x1xf32>
    %35 = vector.extract %34[0, 0, 0] : f32 from vector<1x1x1xf32>
    %36 = vector.broadcast %35 : f32 to vector<1x8x128xf32>
    %c0_10 = arith.constant 0 : index
    %c0_11 = arith.constant 0 : index
    %c0_12 = arith.constant 0 : index
    %37 = vector.load %arg4[%c0_10, %c0_11, %c0_12] : memref<1x8x128xf32, #tpu.memory_space<vmem>>, vector<1x8x128xf32>
    tpu.vector_store %arg4[%c0_10, %c0_11, %c0_12], %36 {strides = array<i32>} : memref<1x8x128xf32, #tpu.memory_space<vmem>>, vector<1x8x128xf32>,
    return
  }
  func.func @transform_0(%arg0: i32) -> (i32, i32) {
    %c0_i32 = arith.constant 0 : i32
    %c0_i32_0 = arith.constant 0 : i32
    return %arg0, %c0_i32 : i32, i32
  }
  func.func @transform_1(%arg0: i32) -> (i32, i32) {
    %c0_i32 = arith.constant 0 : i32
    %c0_i32_0 = arith.constant 0 : i32
    return %arg0, %c0_i32 : i32, i32
  }
  func.func @transform_2(%arg0: i32) -> (i32, i32) {
    %c0_i32 = arith.constant 0 : i32
    %c0_i32_0 = arith.constant 0 : i32
    return %arg0, %c0_i32 : i32, i32
  }
  func.func @transform_3(%arg0: i32) -> (i32, i32, i32) {
    %c0_i32 = arith.constant 0 : i32
    %c0_i32_0 = arith.constant 0 : i32
    %c0_i32_1 = arith.constant 0 : i32
    return %arg0, %c0_i32, %c0_i32_0 : i32, i32, i32
  }
}

</mosaic_0001>

<llo_original>
// kernel: joints_kld_loss.1
$region0: #{joints_kld_loss.1}
  #allocation0 [shape = 'u32[]', space=smem, size = 0x4, offset = 0x4, fixed_abs, tag = 'smem constant byte address 0x4 - core index']
  #allocation1 [shape = 'u32[144,128]{1,0:T(1,128)}', space=vmem, size = 0x12000, scoped, tag = 'internal scratch']
  %s0 = inlined_call_operand.vmem [shape: f32[8,256], index: 0, kind: input, shape index: {}]
  %s1 = inlined_call_operand.vmem [shape: f32[8,256], index: 1, kind: input, shape index: {}]
  %s2 = inlined_call_operand.vmem [shape: f32[8,1], index: 2, kind: input, shape index: {}]
  %s3 = inlined_call_operand.vmem [shape: f32[1,8,128], index: 3, kind: output, shape index: {}]
  %s4 = sld [smem:[#allocation0]]
  $region22: #{joints_kld_loss.1} parent=0
    _
  %s6 = ssub.s32 1, %s4
  %s7 = scalar_select 0, %s6, %s4
  // Predicated region
  $region2: #{joints_kld_loss.1} parent=0 // pred_check
    _
  $region3: #{joints_kld_loss.1} parent=0 // pred_check_branch
    %9 = sbr.rel (0) target = $region5
  $region4: #{joints_kld_loss.1} parent=0 // pred_region
    _
  $region5: #{joints_kld_loss.1} parent=0 // pred_fallthru
    _
  // Predicated region
  $region6: #{joints_kld_loss.1} parent=0 // pred_check
    _
  $region7: #{joints_kld_loss.1} parent=0 // pred_check_branch
    %11 = sbr.rel (0) target = $region9
  $region8: #{joints_kld_loss.1} parent=0 // pred_region
    _
  $region9: #{joints_kld_loss.1} parent=0 // pred_fallthru
    _
  // Predicated region
  $region10: #{joints_kld_loss.1} parent=0 // pred_check
    _
  $region11: #{joints_kld_loss.1} parent=0 // pred_check_branch
    %13 = sbr.rel (0) target = $region13
  $region12: #{joints_kld_loss.1} parent=0 // pred_region
    _
  $region13: #{joints_kld_loss.1} parent=0 // pred_fallthru
    _
  %v14 = vld [vmem:[%s0] sm:$0xff]
  %v15 = vld [vmem:[%s0 + $0x8] sm:$0xff]
  %v16 = vld [vmem:[%s1] sm:$0xff]
  %v17 = vld [vmem:[%s1 + $0x8] sm:$0xff]
  %v18 = vld [vmem:[%s2] sm:$0xff]
  %20 = vset.pattern.permute.xlu0 0
  %21 = vperm.xlu0 %20, %v18
  %v22 = vpop.permute.xlu0 %21
  %v24 = vmul.f32 %v14, %v22
  %v25 = vmul.f32 %v15, %v22
  %v26 = vmul.f32 %v16, %v22
  %v27 = vmul.f32 %v17, %v22
  %v28 = vmax.f32 %v24, %v25
  %29 = vmax.xlane.f32.xlu0 %v28
  %v30 = vpop.xlane.xlu0 %29
  %v31 = vmax.f32 %v26, %v27
  %32 = vmax.xlane.f32.xlu0 %v31
  %v33 = vpop.xlane.xlu0 %32
  %v34 = vsub.f32 %v24, %v30
  %v35 = vsub.f32 %v25, %v30
  %v36 = vmul.f32 %v34, 1.442695
  %v37 = vpow.pop %v36
  %v38 = vmul.f32 %v35, 1.442695
  %v39 = vpow.pop %v38
  %v40 = vadd.f32 %v37, %v39
  %41 = vadd.xlane.f32.xlu0 %v40
  %v42 = vpop.xlane.xlu0 %41
  %v43 = vsub.f32 %v26, %v33
  %v44 = vsub.f32 %v27, %v33
  %v45 = vmul.f32 %v43, 1.442695
  %v46 = vpow.pop %v45
  %v47 = vmul.f32 %v44, 1.442695
  %v48 = vpow.pop %v47
  %v49 = vadd.f32 %v46, %v48
  %50 = vadd.xlane.f32.xlu0 %v49
  %v51 = vpop.xlane.xlu0 %50
  %v52 = vsub.f32 %v26, %v24
  %v53 = vsub.f32 %v27, %v25
  %v54 = vmul.f32 %v46, %v52
  %v55 = vmul.f32 %v48, %v53
  %v56 = vadd.f32 %v54, %v55
  %57 = vadd.xlane.f32.xlu0 %v56
  %v58 = vpop.xlane.xlu0 %57
  %v59 = vrcp.pop %v51
  %v60 = vmul.f32 %v58, %v59
  %v61 = vsub.f32 %v33, %v30
  %v62 = vsub.f32 %v60, %v61
  %v63 = vlog2.pop %v42
  %v64 = vmul.f32 %v63, 0.6931472
  %v65 = vadd.f32 %v62, %v64
  %v66 = vlog2.pop %v51
  %v67 = vmul.f32 %v66, 0.6931472
  %v68 = vsub.f32 %v65, %v67
  %vm69 = vcmask 7168
  %v70 = vsel %vm69, %v68, 0.0
  %71 = vadd.xlane.f32.xlu0 %v70
  %v72 = vpop.xlane.xlu0 %71
  %v73 = vrot.slane %v72, 4
  %v74 = vadd.f32 %v72, %v73
  %v75 = vrot.slane %v74, 2
  %v76 = vadd.f32 %v74, %v75
  %v77 = vrot.slane %v76, 1
  %v78 = vadd.f32 %v76, %v77
  %s79 = vtos %v78
  %v80 = vstv %s79
  %81 = vst [vmem:[%s3] sm:$0xff] %v80
  // Predicated region
  $region14: #{joints_kld_loss.1} parent=0 // pred_check
    _
  $region15: #{joints_kld_loss.1} parent=0 // pred_check_branch
    %83 = sbr.rel (0) target = $region17
  $region16: #{joints_kld_loss.1} parent=0 // pred_region
    _
  $region17: #{joints_kld_loss.1} parent=0 // pred_fallthru
    _
  // Predicated region
  $region18: #{joints_kld_loss.1} parent=0 // pred_check
    _
  $region19: #{joints_kld_loss.1} parent=0 // pred_check_branch
    %85 = sbr.rel (0) target = $region21
  $region20: #{joints_kld_loss.1} parent=0 // pred_region
    _
  $region21: #{joints_kld_loss.1} parent=0 // pred_fallthru
    _

</llo_original>
